<compile_context>
chip_gen: v5e
topology: v5e:2x2
jax: 0.10.0
libtpu: 0.0.40
codegen_flags: <defaults>
</compile_context>

<pallas_src>
import jax
import jax.numpy as jnp
from jax.experimental import pallas as pl
from jax.experimental.pallas import tpu as pltpu

VGG_MEAN = jnp.array([0.485, 0.456, 0.406], jnp.float32).reshape(3, 1, 1)
VGG_STD = jnp.array([0.229, 0.224, 0.225], jnp.float32).reshape(3, 1, 1)


# ----------------------------- Pallas kernels -----------------------------

def _conv_mm_relu_kernel(p_ref, w_ref, b_ref, o_ref, acc_ref):
    """One (tm x tk) @ (tk x Cout) step of a VGG conv3x3 + bias + ReLU.

    Grid = (M tiles over HW, K tiles over 9*Cin); the K axis is the reduction
    ("arbitrary"), accumulated in an f32 VMEM scratch.
    """
    @pl.when(pl.program_id(1) == 0)
    def _init():
        acc_ref[...] = jnp.zeros_like(acc_ref)

    acc_ref[...] += jnp.dot(p_ref[...], w_ref[...],
                            preferred_element_type=jnp.float32)

    @pl.when(pl.program_id(1) == pl.num_programs(1) - 1)
    def _finalize():
        o_ref[...] = jnp.maximum(acc_ref[...] + b_ref[...], 0.0).astype(o_ref.dtype)


def _nnfm_loss_kernel(x_ref, idx_ref, s_ref, o_ref, acc_ref):
    """nn_feat_replace_from_score + cos_loss, TM rendered rows per grid step.

    x_ref:   [TM, C]   rendered-feature rows (bf16)
    idx_ref: [TM, 1]   int32 cached nearest-neighbour match indices
    s_ref:   [HW2, C]  full cached style features (bf16, VMEM resident:
                       constant index_map -> DMA'd once for the whole grid)
    o_ref:   [1, 1]    mean cosine distance (written on the last step)
    acc_ref: [1, 1]    f32 running sum of (1 - cossim)
    """
    step = pl.program_id(0)

    @pl.when(step == 0)
    def _init():
        acc_ref[...] = jnp.zeros_like(acc_ref)

    tm = x_ref.shape[0]
    hw2 = s_ref.shape[0]

    # Row gather (torch.gather over the spatial dim) as a one-hot matmul on
    # the MXU: (TM, HW2) @ (HW2, C) -> gathered target rows in f32.
    onehot = (idx_ref[...] ==
              jax.lax.broadcasted_iota(jnp.int32, (tm, hw2), 1)
              ).astype(jnp.bfloat16)
    t = jnp.dot(onehot, s_ref[...], preferred_element_type=jnp.float32)
    x = x_ref[...].astype(jnp.float32)

    dot = jnp.sum(x * t, axis=-1, keepdims=True)            # [TM, 1]
    an = jnp.sqrt(jnp.sum(x * x, axis=-1, keepdims=True))
    bn = jnp.sqrt(jnp.sum(t * t, axis=-1, keepdims=True))
    # keep the reference eps placement: dot / ((||x||+eps) * (||t||+eps))
    cossim = dot * pl.reciprocal((an + 1e-8) * (bn + 1e-8), approx=False)
    acc_ref[...] += jnp.sum(1.0 - cossim, axis=0, keepdims=True)

    @pl.when(step == pl.num_programs(0) - 1)
    def _finalize():
        total = pl.num_programs(0) * tm
        o_ref[...] = acc_ref[...] * (1.0 / total)


# ----------------------------- helpers -----------------------------

def _round_up(x, m):
    return (x + m - 1) // m * m


def _pick_tile_m(hw):
    for cand in (256, 128, 64, 32, 16, 8):
        if hw % cand == 0:
            return cand
    return hw


def _pick_tile_k(k, max_tk=1152):
    if k <= max_tk:
        return k
    for cand in range(max_tk, 127, -128):
        if cand % 128 == 0 and k % cand == 0:
            return cand
    return k


# ----------------------------- wrappers -----------------------------

def conv3x3_relu(x_hwc, w, b):
    """x_hwc: [H, W, Cin] bf16; w: [Cout, Cin, 3, 3] f32; b: [Cout] f32.

    Returns [H, W, Cout] bf16 (channels-last, zero padding=1, fused ReLU).
    """
    h, wd, cin = x_hwc.shape
    cout = w.shape[0]
    hw = h * wd

    # im2col in channels-last bf16 (lane dim stays = channels).
    # TODO(synk): move the 3x3 gather fully inside the kernel (9 shifted
    # in-kernel loads from a VMEM-resident activation) to drop this 9x buffer.
    xp = jnp.pad(x_hwc, ((1, 1), (1, 1), (0, 0)))
    cols = [xp[dy:dy + h, dx:dx + wd, :] for dy in range(3) for dx in range(3)]
    patches = jnp.concatenate(cols, axis=-1).reshape(hw, 9 * cin)
    patches = patches.astype(jnp.bfloat16)
    w_mat = jnp.transpose(w, (2, 3, 1, 0)).reshape(9 * cin, cout)
    w_mat = w_mat.astype(jnp.bfloat16)

    k = 9 * cin
    k_pad = _round_up(k, 8)                       # first layer: 27 -> 32
    if k_pad != k:
        patches = jnp.pad(patches, ((0, 0), (0, k_pad - k)))
        w_mat = jnp.pad(w_mat, ((0, k_pad - k), (0, 0)))
        k = k_pad
    b_row = b.reshape(1, cout).astype(jnp.float32)

    tm = _pick_tile_m(hw)
    tk = _pick_tile_k(k)
    grid = (hw // tm, k // tk)

    out = pl.pallas_call(
        _conv_mm_relu_kernel,
        out_shape=jax.ShapeDtypeStruct((hw, cout), jnp.bfloat16),
        grid_spec=pltpu.PrefetchScalarGridSpec(
            num_scalar_prefetch=0,
            grid=grid,
            in_specs=[
                pl.BlockSpec((tm, tk), lambda i, kk: (i, kk)),
                pl.BlockSpec((tk, cout), lambda i, kk: (kk, 0)),
                pl.BlockSpec((1, cout), lambda i, kk: (0, 0)),
            ],
            out_specs=pl.BlockSpec((tm, cout), lambda i, kk: (i, 0)),
            scratch_shapes=[pltpu.VMEM((tm, cout), jnp.float32)],
        ),
        compiler_params=pltpu.CompilerParams(
            dimension_semantics=("parallel", "arbitrary"),
            vmem_limit_bytes=32 * 1024 * 1024,
        ),
        cost_estimate=pl.CostEstimate(
            flops=2 * hw * k * cout,
            transcendentals=0,
            bytes_accessed=hw * k * 2 + k * cout * 2 + hw * cout * 2 + cout * 4,
        ),
    )(patches, w_mat, b_row)
    return out.reshape(h, wd, cout)


def maxpool2x2(x_hwc):
    # TODO(synk): fuse the 2x2 pool into the epilogue of the preceding conv
    # kernel to save one activation read+write of HBM traffic per pooled layer.
    h, w, c = x_hwc.shape
    return x_hwc.reshape(h // 2, 2, w // 2, 2, c).max(axis=(1, 3))


def nnfm_loss(x_flat, s_flat, score):
    """x_flat: [HW, C] bf16; s_flat: [HW2, C] bf16; score: [HW] int indices."""
    hw, c = x_flat.shape
    hw2 = s_flat.shape[0]
    idx = score.reshape(-1).astype(jnp.int32)
    assert idx.shape[0] == hw, "one cached match index per rendered position"
    idx = jnp.clip(idx, 0, hw2 - 1).reshape(hw, 1)   # guard OOB gather indices

    tm = _pick_tile_m(hw)
    grid = (hw // tm,)

    # TODO(synk): for very large style feature maps (s_flat too big for VMEM)
    # stream s_flat in K tiles of the one-hot matmul instead of keeping it
    # fully resident.
    loss = pl.pallas_call(
        _nnfm_loss_kernel,
        out_shape=jax.ShapeDtypeStruct((1, 1), jnp.float32),
        grid_spec=pltpu.PrefetchScalarGridSpec(
            num_scalar_prefetch=0,
            grid=grid,
            in_specs=[
                pl.BlockSpec((tm, c), lambda i: (i, 0)),
                pl.BlockSpec((tm, 1), lambda i: (i, 0)),
                pl.BlockSpec((hw2, c), lambda i: (0, 0)),   # resident style feats
            ],
            out_specs=pl.BlockSpec((1, 1), lambda i: (0, 0)),
            scratch_shapes=[pltpu.VMEM((1, 1), jnp.float32)],
        ),
        compiler_params=pltpu.CompilerParams(
            dimension_semantics=("arbitrary",),
            vmem_limit_bytes=32 * 1024 * 1024,
        ),
        cost_estimate=pl.CostEstimate(
            flops=2 * hw * hw2 * c + 6 * hw * c,
            transcendentals=2 * hw,
            bytes_accessed=hw * c * 2 + hw2 * c * 2 + hw * 4 + 4,
        ),
    )(x_flat, idx, s_flat)
    return loss[0, 0]


def init_vgg_params(key):
    # VGG16 features up to layer 15 (block_indexes[2] = [11, 13, 15])
    cfg = [(3, 64), (64, 64), (64, 128), (128, 128),
           (128, 256), (256, 256), (256, 256)]
    params = []
    for cin, cout in cfg:
        key, k1, k2 = jax.random.split(key, 3)
        scale = (2.0 / (cin * 9)) ** 0.5
        w = scale * jax.random.normal(k1, (cout, cin, 3, 3), jnp.float32)
        b = 0.01 * jax.random.normal(k2, (cout,), jnp.float32)
        params.append((w, b))
    return params


def get_block2_feats(img_chw, params):
    """get_feats(img, layers=[11,13,15]) + channel concat (block 2).

    Returns channels-last [H/4, W/4, 768] bf16 features."""
    x = (img_chw - VGG_MEAN) / VGG_STD                  # torchvision Normalize
    x = jnp.transpose(x, (1, 2, 0)).astype(jnp.bfloat16)  # channels-last
    x = conv3x3_relu(x, *params[0])                     # layers 0,1
    x = conv3x3_relu(x, *params[1])                     # layers 2,3
    x = maxpool2x2(x)                                   # layer 4
    x = conv3x3_relu(x, *params[2])                     # layers 5,6
    x = conv3x3_relu(x, *params[3])                     # layers 7,8
    x = maxpool2x2(x)                                   # layer 9
    f11 = conv3x3_relu(x, *params[4])                   # layers 10,11
    f13 = conv3x3_relu(f11, *params[5])                 # layers 12,13
    f15 = conv3x3_relu(f13, *params[6])                 # layers 14,15
    return jnp.concatenate([f11, f13, f15], axis=-1)    # [H/4, W/4, 768]


def cached_nnfm_loss_forward(outputs_img, score, s_feats_hwc, vgg_params):
    """CachedNNFMLoss.forward with blocks=[2], loss_names=['nnfm_loss']."""
    x_feats = get_block2_feats(outputs_img, vgg_params)     # [h, w, 768]
    h, w, c = x_feats.shape
    x_flat = x_feats.reshape(h * w, c)
    s_flat = s_feats_hwc.reshape(-1, c)
    loss = nnfm_loss(x_flat, s_flat, score)
    # factor = 1; only 'nnfm_loss' is active with blocks=[2].
    return {"nnfm_loss": loss, "total": loss}


# TODO(synk): 'color_patch' branch (block 4) needs antialiased bilinear
# F.interpolate + masked patch loss; not exercised with blocks=[2].

if __name__ == "__main__":
    key = jax.random.PRNGKey(0)
    k_img, k_sty, k_score, k_params = jax.random.split(key, 4)

    H = W = 32
    vgg_params = init_vgg_params(k_params)

    outputs = jax.random.uniform(k_img, (3, H, W), jnp.float32)   # rendered img
    style = jax.random.uniform(k_sty, (3, H, W), jnp.float32)     # style img

    # "compute_cache" side: cached style features (s_feats_list[2]) and cached
    # nearest-neighbour match indices (scores['nnfm_loss'][2]).
    s_feats = get_block2_feats(style, vgg_params)                 # [8, 8, 768]
    hw2 = s_feats.shape[0] * s_feats.shape[1]
    score = jax.random.randint(k_score, (hw2,), 0, hw2, jnp.int32)

    fwd = jax.jit(cached_nnfm_loss_forward)
    loss_dict = fwd(outputs, score, s_feats, vgg_params)
    jax.block_until_ready(loss_dict["total"])
    print("KERNEL_OK")
</pallas_src>

<mosaic_0001>
module attributes {stable_mosaic.version = 11 : i64} {
  func.func @_conv_mm_relu_kernel(%arg0: i32, %arg1: i32, %arg2: memref<256x32xbf16, #tpu.memory_space<vmem>>, %arg3: memref<32x64xbf16, #tpu.memory_space<vmem>>, %arg4: memref<1x64xf32, #tpu.memory_space<vmem>>, %arg5: memref<256x64xbf16, #tpu.memory_space<vmem>>, %arg6: memref<256x64xf32, #tpu.memory_space<vmem>>) attributes {dimension_semantics = [#tpu.dimension_semantics<parallel>, #tpu.dimension_semantics<arbitrary>], iteration_bounds = array<i64: 4, 1>, scalar_prefetch = 0 : i64, scratch_operands = 1 : i64, tpu.core_type = #tpu.core_type<tc>, window_params = [{transform_indices = @transform_0, window_bounds = array<i64: 256, 32>}, {transform_indices = @transform_1, window_bounds = array<i64: 32, 64>}, {pipeline_mode = #tpu.pipeline_mode<synchronous>, transform_indices = @transform_2, window_bounds = array<i64: 1, 64>}, {transform_indices = @transform_3, window_bounds = array<i64: 256, 64>}]} {
    %c0_i32 = arith.constant 0 : i32
    %0 = arith.cmpi eq, %arg1, %c0_i32 : i32
    %1 = arith.extui %0 : i1 to i32
    %c0_i32_0 = arith.constant 0 : i32
    %2 = arith.cmpi ne, %1, %c0_i32_0 : i32
    scf.if %2 {
      %cst_10 = arith.constant 0.000000e+00 : f32
      %12 = vector.broadcast %cst_10 : f32 to vector<256x64xf32>
      %c0_11 = arith.constant 0 : index
      %c0_12 = arith.constant 0 : index
      %13 = vector.load %arg6[%c0_11, %c0_12] : memref<256x64xf32, #tpu.memory_space<vmem>>, vector<256x64xf32>
      tpu.vector_store %arg6[%c0_11, %c0_12], %12 {strides = array<i32>} : memref<256x64xf32, #tpu.memory_space<vmem>>, vector<256x64xf32>,
    } else {
    }
    %c0 = arith.constant 0 : index
    %c0_1 = arith.constant 0 : index
    %3 = vector.load %arg6[%c0, %c0_1] : memref<256x64xf32, #tpu.memory_space<vmem>>, vector<256x64xf32>
    %c0_2 = arith.constant 0 : index
    %c0_3 = arith.constant 0 : index
    %4 = vector.load %arg2[%c0_2, %c0_3] : memref<256x32xbf16, #tpu.memory_space<vmem>>, vector<256x32xbf16>
    %c0_4 = arith.constant 0 : index
    %c0_5 = arith.constant 0 : index
    %5 = vector.load %arg3[%c0_4, %c0_5] : memref<32x64xbf16, #tpu.memory_space<vmem>>, vector<32x64xbf16>
    %cst = arith.constant dense<0.000000e+00> : vector<256x64xf32>
    %6 = tpu.matmul %4, %5, %cst {dimension_numbers = #tpu.dot_dimension_numbers<[1], [0], [0], [1], [0, 0, 1, 1], [], []>} : vector<256x32xbf16>, vector<32x64xbf16>, vector<256x64xf32> -> vector<256x64xf32>
    %7 = arith.addf %3, %6 : vector<256x64xf32>
    %c0_6 = arith.constant 0 : index
    %c0_7 = arith.constant 0 : index
    %8 = vector.load %arg6[%c0_6, %c0_7] : memref<256x64xf32, #tpu.memory_space<vmem>>, vector<256x64xf32>
    tpu.vector_store %arg6[%c0_6, %c0_7], %7 {strides = array<i32>} : memref<256x64xf32, #tpu.memory_space<vmem>>, vector<256x64xf32>,
    %c0_i32_8 = arith.constant 0 : i32
    %9 = arith.cmpi eq, %arg1, %c0_i32_8 : i32
    %10 = arith.extui %9 : i1 to i32
    %c0_i32_9 = arith.constant 0 : i32
    %11 = arith.cmpi ne, %10, %c0_i32_9 : i32
    scf.if %11 {
      %c0_10 = arith.constant 0 : index
      %c0_11 = arith.constant 0 : index
      %12 = vector.load %arg6[%c0_10, %c0_11] : memref<256x64xf32, #tpu.memory_space<vmem>>, vector<256x64xf32>
      %c0_12 = arith.constant 0 : index
      %c0_13 = arith.constant 0 : index
      %13 = vector.load %arg4[%c0_12, %c0_13] : memref<1x64xf32, #tpu.memory_space<vmem>>, vector<1x64xf32>
      %14 = vector.broadcast %13 : vector<1x64xf32> to vector<256x64xf32>
      %15 = arith.addf %12, %14 : vector<256x64xf32>
      %cst_14 = arith.constant 0.000000e+00 : f32
      %16 = vector.broadcast %cst_14 : f32 to vector<256x64xf32>
      %17 = arith.maximumf %15, %16 : vector<256x64xf32>
      %18 = arith.truncf %17 : vector<256x64xf32> to vector<256x64xbf16>
      %c0_15 = arith.constant 0 : index
      %c0_16 = arith.constant 0 : index
      %19 = vector.load %arg5[%c0_15, %c0_16] : memref<256x64xbf16, #tpu.memory_space<vmem>>, vector<256x64xbf16>
      tpu.vector_store %arg5[%c0_15, %c0_16], %18 {strides = array<i32>} : memref<256x64xbf16, #tpu.memory_space<vmem>>, vector<256x64xbf16>,
    } else {
    }
    return
  }
  func.func @transform_0(%arg0: i32, %arg1: i32) -> (i32, i32) {
    %c0_i32 = arith.constant 0 : i32
    return %arg0, %arg1 : i32, i32
  }
  func.func @transform_1(%arg0: i32, %arg1: i32) -> (i32, i32) {
    %c0_i32 = arith.constant 0 : i32
    %c0_i32_0 = arith.constant 0 : i32
    return %arg1, %c0_i32 : i32, i32
  }
  func.func @transform_2(%arg0: i32, %arg1: i32) -> (i32, i32) {
    %c0_i32 = arith.constant 0 : i32
    %c0_i32_0 = arith.constant 0 : i32
    %c0_i32_1 = arith.constant 0 : i32
    return %c0_i32, %c0_i32_0 : i32, i32
  }
  func.func @transform_3(%arg0: i32, %arg1: i32) -> (i32, i32) {
    %c0_i32 = arith.constant 0 : i32
    %c0_i32_0 = arith.constant 0 : i32
    return %arg0, %c0_i32 : i32, i32
  }
}

</mosaic_0001>

<llo_original>
// kernel: tpu_custom_call.1
$region0: #{tpu_custom_call.1}
  #allocation0 [shape = 'u32[]', space=smem, size = 0x4, offset = 0x4, fixed_abs, tag = 'smem constant byte address 0x4 - core index']
  #allocation1 [shape = 'u32[72,128]{1,0:T(1,128)}', space=vmem, size = 0x9000, scoped, tag = 'internal scratch']
  #allocation2 [shape = 'f32[256,64]{1,0:T(8,128)}', space=vmem, size = 0x20000, scoped, tag = 'scratch operand']
  %s0 = inlined_call_operand.vmem [shape: bf16[1024,32], index: 0, kind: input, shape index: {}]
  %s1 = inlined_call_operand.vmem [shape: bf16[32,64], index: 1, kind: input, shape index: {}]
  %s2 = inlined_call_operand.vmem [shape: f32[1,64], index: 2, kind: input, shape index: {}]
  %s3 = inlined_call_operand.vmem [shape: bf16[1024,64], index: 3, kind: output, shape index: {}]
  %s4 = sld [smem:[#allocation0]]
  $region53: #{tpu_custom_call.1} parent=0
    _
  %s6 = ssub.s32 1, %s4
  %s7 = scalar_select 0, %s6, %s4
  loop: start=0, step=1, limit=6
  $region2: #{tpu_custom_call.1} parent=0 // loop_pre_header
    _
  $region3: #{tpu_custom_call.1} parent=0 // loop_header
    %s9 = sphi 0, %s13
    %p10 = scmp.ge.s32.totalorder %s9, 6
    %s16 = sphi 0, %s28
    %s17 = sphi 0, %s24
    %s18 = sphi 0, %s16
    %s19 = sphi 0, %s17
    %s20 = sphi 0, %s18
    %s21 = sphi 0, %s19
    %s33 = sphi 0, %s35
    %s36 = sphi 0, %s33
    %s37 = sphi 0, %s36
    %s53 = sphi 0, %s37
    %s59 = sphi 0, %s61
    %s62 = sphi 0, %s59
    %s63 = sphi 0, %s62
    %s79 = sphi 0, %s63
    %s83 = sphi 0, %s83
    %s85 = sphi 0, %s83
    %s86 = sphi 0, %s85
    %s100 = sphi 0, %s86
    %s106 = sphi 0, %s108
    %s109 = sphi 0, %s106
    %s110 = sphi 0, %s109
    %s126 = sphi 0, %s110
  $region4: #{tpu_custom_call.1} parent=0 // loop_header_branch
    %12 = sbr.rel (%p10) target = $region8
  $region5: #{tpu_custom_call.1} parent=0 // loop_body
    %s14 = ssub.s32 %s9, 1
    %s15 = ssub.s32 %s9, 2
    %s22 = sadd.s32 1, %s17
    %p23 = scmp.ge.s32.totalorder %s22, 1
    %s24 = scalar_select %p23, 0, %s22
    %s25 = sadd.s32 1, %s16
    %s26 = scalar_select %p23, %s25, %s16
    %p27 = scmp.ge.s32.totalorder %s26, 4
    %s28 = scalar_select %p27, 0, %s26
    %s29 = ssub.s32 %s16, %s28
    %s30 = ssub.s32 %s17, %s24
    %s31 = sor.u32 %s29, %s30
    %p32 = scmp.eq.s32.totalorder %s31, 0
    %s34 = sadd.s32 %s33, 1
    %s35 = scalar_select %p32, %s33, %s34
    %p38 = pneg %p32
    %p39 = scmp.eq.s32.totalorder %s9, 3
    %p40 = por %p38, %p39
    %p41 = scmp.ne.s32.totalorder %s33, %s36
    %p42 = scmp.eq.s32.totalorder %s9, 0
    %p43 = por %p41, %p42
    %p44 = scmp.ne.s32.totalorder %s33, %s36
    %p45 = scmp.eq.s32.totalorder %s14, 3
    %p46 = por %p44, %p45
    %p47 = scmp.ne.s32.totalorder %s36, %s37
    %p48 = scmp.eq.s32.totalorder %s14, 0
    %p49 = por %p47, %p48
    %p50 = scmp.ne.s32.totalorder %s36, %s37
    %p51 = scmp.eq.s32.totalorder %s15, 3
    %p52 = por %p50, %p51
    %p54 = scmp.ne.s32.totalorder %s37, %s53
    %p55 = scmp.eq.s32.totalorder %s15, 0
    %p56 = por %p54, %p55
    %s57 = ssub.s32 %s17, %s24
    %p58 = scmp.eq.s32.totalorder %s57, 0
    %s60 = sadd.s32 %s59, 1
    %s61 = scalar_select %p58, %s59, %s60
    %p64 = pneg %p58
    %p65 = scmp.eq.s32.totalorder %s9, 3
    %p66 = por %p64, %p65
    %p67 = scmp.ne.s32.totalorder %s59, %s62
    %p68 = scmp.eq.s32.totalorder %s9, 0
    %p69 = por %p67, %p68
    %p70 = scmp.ne.s32.totalorder %s59, %s62
    %p71 = scmp.eq.s32.totalorder %s14, 3
    %p72 = por %p70, %p71
    %p73 = scmp.ne.s32.totalorder %s62, %s63
    %p74 = scmp.eq.s32.totalorder %s14, 0
    %p75 = por %p73, %p74
    %p76 = scmp.ne.s32.totalorder %s62, %s63
    %p77 = scmp.eq.s32.totalorder %s15, 3
    %p78 = por %p76, %p77
    %p80 = scmp.ne.s32.totalorder %s63, %s79
    %p81 = scmp.eq.s32.totalorder %s15, 0
    %p82 = por %p80, %p81
    %s84 = sadd.s32 %s83, 1
    %p87 = scmp.eq.s32.totalorder %s9, 3
    %p88 = scmp.ne.s32.totalorder %s83, %s85
    %p89 = scmp.eq.s32.totalorder %s9, 0
    %p90 = por %p88, %p89
    %p91 = scmp.ne.s32.totalorder %s83, %s85
    %p92 = scmp.eq.s32.totalorder %s14, 3
    %p93 = por %p91, %p92
    %p94 = scmp.ne.s32.totalorder %s85, %s86
    %p95 = scmp.eq.s32.totalorder %s14, 0
    %p96 = por %p94, %p95
    %p97 = scmp.ne.s32.totalorder %s85, %s86
    %p98 = scmp.eq.s32.totalorder %s15, 3
    %p99 = por %p97, %p98
    %p101 = scmp.ne.s32.totalorder %s86, %s100
    %p102 = scmp.eq.s32.totalorder %s15, 0
    %p103 = por %p101, %p102
    %s104 = ssub.s32 %s16, %s28
    %p105 = scmp.eq.s32.totalorder %s104, 0
    %s107 = sadd.s32 %s106, 1
    %s108 = scalar_select %p105, %s106, %s107
    %p111 = pneg %p105
    %p112 = scmp.eq.s32.totalorder %s9, 3
    %p113 = por %p111, %p112
    %p114 = scmp.ne.s32.totalorder %s106, %s109
    %p115 = scmp.eq.s32.totalorder %s9, 0
    %p116 = por %p114, %p115
    %p117 = scmp.ne.s32.totalorder %s106, %s109
    %p118 = scmp.eq.s32.totalorder %s14, 3
    %p119 = por %p117, %p118
    %p120 = scmp.ne.s32.totalorder %s109, %s110
    %p121 = scmp.eq.s32.totalorder %s14, 0
    %p122 = por %p120, %p121
    %p123 = scmp.ne.s32.totalorder %s109, %s110
    %p124 = scmp.eq.s32.totalorder %s15, 3
    %p125 = por %p123, %p124
    %p127 = scmp.ne.s32.totalorder %s110, %s126
    %p128 = scmp.eq.s32.totalorder %s15, 0
    %p129 = por %p127, %p128
    %p130 = scmp.le.s32.totalorder 1, %s9
    %p131 = scmp.lt.s32.totalorder %s9, 5
    %p132 = pnand %p130, %p131
    %p133 = pneg %p132
    // Predicated region
    $region9: #{tpu_custom_call.1} parent=5 // pred_check
      _
    $region10: #{tpu_custom_call.1} parent=5 // pred_check_branch
      %135 = sbr.rel (%p132) target = $region12
    $region11: #{tpu_custom_call.1} parent=5 // pred_region
      %s136 = ssub.s32 %s9, 1
      // Predicated region
      $region13: #{tpu_custom_call.1} parent=11 // pred_check
        %p137 = pneg %p75
      $region14: #{tpu_custom_call.1} parent=11 // pred_check_branch
        %139 = sbr.rel (%p137) target = $region16
      $region15: #{tpu_custom_call.1} parent=11 // pred_region
        %s140 = smul.u32 4, %s19
        %p141 = scmp.lt.s32.totalorder %s140, 3
        %s142 = scalar_select %p141, %s140, 3
        %s143 = smul.addr %s142, 4
        %s144 = scalar_lea.vmem %s1, %s143
        %s145 = smul.u32 4, %s19
      $region16: #{tpu_custom_call.1} parent=11 // pred_fallthru
        _
      // Predicated region
      $region17: #{tpu_custom_call.1} parent=11 // pred_check
        %p146 = pneg %p96
      $region18: #{tpu_custom_call.1} parent=11 // pred_check_branch
        %148 = sbr.rel (%p146) target = $region20
      $region19: #{tpu_custom_call.1} parent=11 // pred_region
        _
      $region20: #{tpu_custom_call.1} parent=11 // pred_fallthru
        _
    $region12: #{tpu_custom_call.1} parent=5 // pred_fallthru
      _
    %p149 = scmp.lt.s32.totalorder %s9, 4
    // Predicated region
    $region21: #{tpu_custom_call.1} parent=5 // pred_check
      %p150 = pneg %p149
    $region22: #{tpu_custom_call.1} parent=5 // pred_check_branch
      %152 = sbr.rel (%p150) target = $region24
    $region23: #{tpu_custom_call.1} parent=5 // pred_region
      // Predicated region
      $region25: #{tpu_custom_call.1} parent=23 // pred_check
        %p153 = pneg %p43
      $region26: #{tpu_custom_call.1} parent=23 // pred_check_branch
        %155 = sbr.rel (%p153) target = $region28
      $region27: #{tpu_custom_call.1} parent=23 // pred_region
        %s156 = smul.u32 32, %s16
        %p157 = scmp.lt.s32.totalorder %s156, 127
        %s158 = scalar_select %p157, %s156, 127
        %p159 = scmp.lt.s32.totalorder %s17, 0
        %s160 = scalar_select %p159, %s17, 0
        %s161 = sadd.s32 %s160, %s158
        %s162 = smul.addr %s161, 4
        %s163 = scalar_lea.vmem %s0, %s162
        %s164 = smul.u32 32, %s16
      $region28: #{tpu_custom_call.1} parent=23 // pred_fallthru
        _
    $region24: #{tpu_custom_call.1} parent=5 // pred_fallthru
      _
    %p165 = scmp.le.s32.totalorder 1, %s9
    %p166 = scmp.lt.s32.totalorder %s9, 5
    %p167 = pnand %p165, %p166
    %p168 = pneg %p167
    // Predicated region
    $region29: #{tpu_custom_call.1} parent=5 // pred_check
      _
    $region30: #{tpu_custom_call.1} parent=5 // pred_check_branch
      %170 = sbr.rel (%p167) target = $region32
    $region31: #{tpu_custom_call.1} parent=5 // pred_region
      %s171 = ssub.s32 %s9, 1
      %s172 = smul.u32 32, %s18
      %p173 = scmp.lt.s32.totalorder %s172, 127
      %s174 = scalar_select %p173, %s172, 127
      %p175 = scmp.lt.s32.totalorder %s19, 0
      %s176 = scalar_select %p175, %s19, 0
      %s177 = sadd.s32 %s176, %s174
      %s178 = smul.addr %s177, 4
      %s179 = scalar_lea.vmem %s0, %s178
      %p180 = pneg %p49
      %p181 = pneg %p46
      %s182 = smul.u32 4, %s19
      %p183 = scmp.lt.s32.totalorder %s182, 3
      %s184 = scalar_select %p183, %s182, 3
      %s185 = smul.addr %s184, 4
      %s186 = scalar_lea.vmem %s1, %s185
      %p187 = pneg %p75
      %p188 = pneg %p72
      %p189 = pneg %p96
      %p190 = pneg %p93
      %p191 = pneg %p122
      %p192 = pneg %p119
      %s193 = smul.u32 32, %s18
      %p194 = scmp.lt.s32.totalorder %s193, 127
      %s195 = scalar_select %p194, %s193, 127
      %s196 = smul.addr %s195, 4
      %s197 = scalar_lea.vmem %s3, %s196
      %s198 = smul.u32 32, %s18
      %p199 = scmp.lt.s32.totalorder %s198, 127
      %s200 = scalar_select %p199, %s198, 127
      %p201 = scmp.lt.s32.totalorder %s19, 0
      %s202 = scalar_select %p201, %s19, 0
      %s203 = sadd.s32 %s202, %s200
      %s204 = smul.addr %s203, 4
      %s205 = scalar_lea.vmem %s0, %s204
      %s206 = smul.u32 32, %s18
      %s207 = smul.u32 4, %s19
      %p208 = scmp.lt.s32.totalorder %s207, 3
      %s209 = scalar_select %p208, %s207, 3
      %s210 = smul.addr %s209, 4
      %s211 = scalar_lea.vmem %s1, %s210
      %s212 = smul.u32 4, %s19
      %s213 = smul.u32 32, %s18
      %p214 = scmp.lt.s32.totalorder %s213, 127
      %s215 = scalar_select %p214, %s213, 127
      %s216 = smul.addr %s215, 4
      %s217 = scalar_lea.vmem %s3, %s216
      %s218 = smul.u32 32, %s18
      %p220 = scmp.eq.s32.totalorder %s19, 0
      // Predicated region
      $region33: #{tpu_custom_call.1} parent=31 // pred_check
        %p221 = pneg %p220
      $region34: #{tpu_custom_call.1} parent=31 // pred_check_branch
        %223 = sbr.rel (%p221) target = $region36
      $region35: #{tpu_custom_call.1} parent=31 // pred_region
        %vm224 = vcmask 523264
        %225 = vst.msk [vmem:[#allocation2] sm:$0xff] %vm224, 0.0
        %226 = vst.msk [vmem:[#allocation2 + $0x8] sm:$0xff] %vm224, 0.0
        %227 = vst.msk [vmem:[#allocation2 + $0x10] sm:$0xff] %vm224, 0.0
        %228 = vst.msk [vmem:[#allocation2 + $0x18] sm:$0xff] %vm224, 0.0
        %229 = vst.msk [vmem:[#allocation2 + $0x20] sm:$0xff] %vm224, 0.0
        %230 = vst.msk [vmem:[#allocation2 + $0x28] sm:$0xff] %vm224, 0.0
        %231 = vst.msk [vmem:[#allocation2 + $0x30] sm:$0xff] %vm224, 0.0
        %232 = vst.msk [vmem:[#allocation2 + $0x38] sm:$0xff] %vm224, 0.0
        %233 = vst.msk [vmem:[#allocation2 + $0x40] sm:$0xff] %vm224, 0.0
        %234 = vst.msk [vmem:[#allocation2 + $0x48] sm:$0xff] %vm224, 0.0
        %235 = vst.msk [vmem:[#allocation2 + $0x50] sm:$0xff] %vm224, 0.0
        %236 = vst.msk [vmem:[#allocation2 + $0x58] sm:$0xff] %vm224, 0.0
        %237 = vst.msk [vmem:[#allocation2 + $0x60] sm:$0xff] %vm224, 0.0
        %238 = vst.msk [vmem:[#allocation2 + $0x68] sm:$0xff] %vm224, 0.0
        %239 = vst.msk [vmem:[#allocation2 + $0x70] sm:$0xff] %vm224, 0.0
        %240 = vst.msk [vmem:[#allocation2 + $0x78] sm:$0xff] %vm224, 0.0
        %241 = vst.msk [vmem:[#allocation2 + $0x80] sm:$0xff] %vm224, 0.0
        %242 = vst.msk [vmem:[#allocation2 + $0x88] sm:$0xff] %vm224, 0.0
        %243 = vst.msk [vmem:[#allocation2 + $0x90] sm:$0xff] %vm224, 0.0
        %244 = vst.msk [vmem:[#allocation2 + $0x98] sm:$0xff] %vm224, 0.0
        %245 = vst.msk [vmem:[#allocation2 + $0xa0] sm:$0xff] %vm224, 0.0
        %246 = vst.msk [vmem:[#allocation2 + $0xa8] sm:$0xff] %vm224, 0.0
        %247 = vst.msk [vmem:[#allocation2 + $0xb0] sm:$0xff] %vm224, 0.0
        %248 = vst.msk [vmem:[#allocation2 + $0xb8] sm:$0xff] %vm224, 0.0
        %249 = vst.msk [vmem:[#allocation2 + $0xc0] sm:$0xff] %vm224, 0.0
        %250 = vst.msk [vmem:[#allocation2 + $0xc8] sm:$0xff] %vm224, 0.0
        %251 = vst.msk [vmem:[#allocation2 + $0xd0] sm:$0xff] %vm224, 0.0
        %252 = vst.msk [vmem:[#allocation2 + $0xd8] sm:$0xff] %vm224, 0.0
        %253 = vst.msk [vmem:[#allocation2 + $0xe0] sm:$0xff] %vm224, 0.0
        %254 = vst.msk [vmem:[#allocation2 + $0xe8] sm:$0xff] %vm224, 0.0
        %255 = vst.msk [vmem:[#allocation2 + $0xf0] sm:$0xff] %vm224, 0.0
        %256 = vst.msk [vmem:[#allocation2 + $0xf8] sm:$0xff] %vm224, 0.0
      $region36: #{tpu_custom_call.1} parent=31 // pred_fallthru
        _
      %v257 = vld [vmem:[#allocation2] sm:$0xff]
      %v258 = vld [vmem:[#allocation2 + $0x8] sm:$0xff]
      %v259 = vld [vmem:[#allocation2 + $0x10] sm:$0xff]
      %v260 = vld [vmem:[#allocation2 + $0x18] sm:$0xff]
      %v261 = vld [vmem:[#allocation2 + $0x20] sm:$0xff]
      %v262 = vld [vmem:[#allocation2 + $0x28] sm:$0xff]
      %v263 = vld [vmem:[#allocation2 + $0x30] sm:$0xff]
      %v264 = vld [vmem:[#allocation2 + $0x38] sm:$0xff]
      %v265 = vld [vmem:[#allocation2 + $0x40] sm:$0xff]
      %v266 = vld [vmem:[#allocation2 + $0x48] sm:$0xff]
      %v267 = vld [vmem:[#allocation2 + $0x50] sm:$0xff]
      %v268 = vld [vmem:[#allocation2 + $0x58] sm:$0xff]
      %v269 = vld [vmem:[#allocation2 + $0x60] sm:$0xff]
      %v270 = vld [vmem:[#allocation2 + $0x68] sm:$0xff]
      %v271 = vld [vmem:[#allocation2 + $0x70] sm:$0xff]
      %v272 = vld [vmem:[#allocation2 + $0x78] sm:$0xff]
      %v273 = vld [vmem:[#allocation2 + $0x80] sm:$0xff]
      %v274 = vld [vmem:[#allocation2 + $0x88] sm:$0xff]
      %v275 = vld [vmem:[#allocation2 + $0x90] sm:$0xff]
      %v276 = vld [vmem:[#allocation2 + $0x98] sm:$0xff]
      %v277 = vld [vmem:[#allocation2 + $0xa0] sm:$0xff]
      %v278 = vld [vmem:[#allocation2 + $0xa8] sm:$0xff]
      %v279 = vld [vmem:[#allocation2 + $0xb0] sm:$0xff]
      %v280 = vld [vmem:[#allocation2 + $0xb8] sm:$0xff]
      %v281 = vld [vmem:[#allocation2 + $0xc0] sm:$0xff]
      %v282 = vld [vmem:[#allocation2 + $0xc8] sm:$0xff]
      %v283 = vld [vmem:[#allocation2 + $0xd0] sm:$0xff]
      %v284 = vld [vmem:[#allocation2 + $0xd8] sm:$0xff]
      %v285 = vld [vmem:[#allocation2 + $0xe0] sm:$0xff]
      %v286 = vld [vmem:[#allocation2 + $0xe8] sm:$0xff]
      %v287 = vld [vmem:[#allocation2 + $0xf0] sm:$0xff]
      %v288 = vld [vmem:[#allocation2 + $0xf8] sm:$0xff]
      %v289 = vld [vmem:[%s205] sm:$0xf]
      %v290 = vld [vmem:[%s205 + $0x4] sm:$0xf]
      %v291 = vld [vmem:[%s205 + $0x8] sm:$0xf]
      %v292 = vld [vmem:[%s205 + $0xc] sm:$0xf]
      %v293 = vld [vmem:[%s205 + $0x10] sm:$0xf]
      %v294 = vld [vmem:[%s205 + $0x14] sm:$0xf]
      %v295 = vld [vmem:[%s205 + $0x18] sm:$0xf]
      %v296 = vld [vmem:[%s205 + $0x1c] sm:$0xf]
      %v297 = vld [vmem:[%s205 + $0x20] sm:$0xf]
      %v298 = vld [vmem:[%s205 + $0x24] sm:$0xf]
      %v299 = vld [vmem:[%s205 + $0x28] sm:$0xf]
      %v300 = vld [vmem:[%s205 + $0x2c] sm:$0xf]
      %v301 = vld [vmem:[%s205 + $0x30] sm:$0xf]
      %v302 = vld [vmem:[%s205 + $0x34] sm:$0xf]
      %v303 = vld [vmem:[%s205 + $0x38] sm:$0xf]
      %v304 = vld [vmem:[%s205 + $0x3c] sm:$0xf]
      %v305 = vld [vmem:[%s205 + $0x40] sm:$0xf]
      %v306 = vld [vmem:[%s205 + $0x44] sm:$0xf]
      %v307 = vld [vmem:[%s205 + $0x48] sm:$0xf]
      %v308 = vld [vmem:[%s205 + $0x4c] sm:$0xf]
      %v309 = vld [vmem:[%s205 + $0x50] sm:$0xf]
      %v310 = vld [vmem:[%s205 + $0x54] sm:$0xf]
      %v311 = vld [vmem:[%s205 + $0x58] sm:$0xf]
      %v312 = vld [vmem:[%s205 + $0x5c] sm:$0xf]
      %v313 = vld [vmem:[%s205 + $0x60] sm:$0xf]
      %v314 = vld [vmem:[%s205 + $0x64] sm:$0xf]
      %v315 = vld [vmem:[%s205 + $0x68] sm:$0xf]
      %v316 = vld [vmem:[%s205 + $0x6c] sm:$0xf]
      %v317 = vld [vmem:[%s205 + $0x70] sm:$0xf]
      %v318 = vld [vmem:[%s205 + $0x74] sm:$0xf]
      %v319 = vld [vmem:[%s205 + $0x78] sm:$0xf]
      %v320 = vld [vmem:[%s205 + $0x7c] sm:$0xf]
      %v321 = vld [vmem:[%s211] sm:$0xf]
      %v322 = vld [vmem:[%s211 + $0x4] sm:$0xf]
      %v323 = vld [vmem:[%s211 + $0x8] sm:$0xf]
      %v324 = vld [vmem:[%s211 + $0xc] sm:$0xf]
      %v357 = vunpack.c.l.b16 %v289
      %v358 = vunpack.c.l.b16 %v290
      %v359 = vunpack.c.l.b16 %v291
      %v360 = vunpack.c.l.b16 %v292
      %v361 = vunpack.c.l.b16 %v293
      %v362 = vunpack.c.l.b16 %v294
      %v363 = vunpack.c.l.b16 %v295
      %v364 = vunpack.c.l.b16 %v296
      %v365 = vunpack.c.l.b16 %v297
      %v366 = vunpack.c.l.b16 %v298
      %v367 = vunpack.c.l.b16 %v299
      %v368 = vunpack.c.l.b16 %v300
      %v369 = vunpack.c.l.b16 %v301
      %v370 = vunpack.c.l.b16 %v302
      %v371 = vunpack.c.l.b16 %v303
      %v372 = vunpack.c.l.b16 %v304
      %v373 = vunpack.c.l.b16 %v305
      %v374 = vunpack.c.l.b16 %v306
      %v375 = vunpack.c.l.b16 %v307
      %v376 = vunpack.c.l.b16 %v308
      %v377 = vunpack.c.l.b16 %v309
      %v378 = vunpack.c.l.b16 %v310
      %v379 = vunpack.c.l.b16 %v311
      %v380 = vunpack.c.l.b16 %v312
      %v381 = vunpack.c.l.b16 %v313
      %v382 = vunpack.c.l.b16 %v314
      %v383 = vunpack.c.l.b16 %v315
      %v384 = vunpack.c.l.b16 %v316
      %v385 = vunpack.c.l.b16 %v317
      %v386 = vunpack.c.l.b16 %v318
      %v387 = vunpack.c.l.b16 %v319
      %v388 = vunpack.c.l.b16 %v320
      %v389 = vpack.c.b16 %v358, %v357
      %v390 = vpack.c.b16 %v360, %v359
      %v391 = vpack.c.b16 %v362, %v361
      %v392 = vpack.c.b16 %v364, %v363
      %v393 = vpack.c.b16 %v366, %v365
      %v394 = vpack.c.b16 %v368, %v367
      %v395 = vpack.c.b16 %v370, %v369
      %v396 = vpack.c.b16 %v372, %v371
      %v397 = vpack.c.b16 %v374, %v373
      %v398 = vpack.c.b16 %v376, %v375
      %v399 = vpack.c.b16 %v378, %v377
      %v400 = vpack.c.b16 %v380, %v379
      %v401 = vpack.c.b16 %v382, %v381
      %v402 = vpack.c.b16 %v384, %v383
      %v403 = vpack.c.b16 %v386, %v385
      %v404 = vpack.c.b16 %v388, %v387
      %v409 = vunpack.c.l.b16 %v321
      %v410 = vunpack.c.l.b16 %v322
      %v411 = vunpack.c.l.b16 %v323
      %v412 = vunpack.c.l.b16 %v324
      %v413 = vpack.c.b16 %v410, %v409
      %v414 = vpack.c.b16 %v412, %v411
      %vm417 = vcmask 261120
      %v419 = vsel %vm417, %v389, 0
      %v422 = vsel %vm417, %v390, 0
      %v425 = vsel %vm417, %v391, 0
      %v428 = vsel %vm417, %v392, 0
      %v431 = vsel %vm417, %v393, 0
      %v434 = vsel %vm417, %v394, 0
      %v437 = vsel %vm417, %v395, 0
      %v440 = vsel %vm417, %v396, 0
      %v443 = vsel %vm417, %v397, 0
      %v446 = vsel %vm417, %v398, 0
      %v449 = vsel %vm417, %v399, 0
      %v452 = vsel %vm417, %v400, 0
      %v455 = vsel %vm417, %v401, 0
      %v458 = vsel %vm417, %v402, 0
      %v461 = vsel %vm417, %v403, 0
      %v464 = vsel %vm417, %v404, 0
      %466 = vmatpush.bf16.msra.mxu0 0
      %467 = vmatpush.bf16.msra.mxu0 0
      %468 = vmatpush.bf16.msra.mxu0 0
      %469 = vmatpush.bf16.msra.mxu0 0
      %470 = vmatpush.bf16.msra.mxu0 0
      %471 = vmatpush.bf16.msra.mxu0 0
      %472 = vmatpush.bf16.msra.mxu0 %v414
      %473 = vmatpush.bf16.msra.mxu0 %v413
      %474 = vmatmul.bf16.gmra.mxu0 %v419
      %v475 = vpop.f32.mrf.mxu0
      %v476 = vadd.f32 0.0, %v475
      %v477 = vpop.f32.mrf.mxu0
      %v478 = vadd.f32 0.0, %v477
      %479 = vmatmul.bf16.gmra.mxu0 %v422
      %v480 = vpop.f32.mrf.mxu0
      %v481 = vadd.f32 0.0, %v480
      %v482 = vpop.f32.mrf.mxu0
      %v483 = vadd.f32 0.0, %v482
      %484 = vmatmul.bf16.gmra.mxu0 %v425
      %v485 = vpop.f32.mrf.mxu0
      %v486 = vadd.f32 0.0, %v485
      %v487 = vpop.f32.mrf.mxu0
      %v488 = vadd.f32 0.0, %v487
      %489 = vmatmul.bf16.gmra.mxu0 %v428
      %v490 = vpop.f32.mrf.mxu0
      %v491 = vadd.f32 0.0, %v490
      %v492 = vpop.f32.mrf.mxu0
      %v493 = vadd.f32 0.0, %v492
      %494 = vmatmul.bf16.gmra.mxu0 %v431
      %v495 = vpop.f32.mrf.mxu0
      %v496 = vadd.f32 0.0, %v495
      %v497 = vpop.f32.mrf.mxu0
      %v498 = vadd.f32 0.0, %v497
      %499 = vmatmul.bf16.gmra.mxu0 %v434
      %v500 = vpop.f32.mrf.mxu0
      %v501 = vadd.f32 0.0, %v500
      %v502 = vpop.f32.mrf.mxu0
      %v503 = vadd.f32 0.0, %v502
      %504 = vmatmul.bf16.gmra.mxu0 %v437
      %v505 = vpop.f32.mrf.mxu0
      %v506 = vadd.f32 0.0, %v505
      %v507 = vpop.f32.mrf.mxu0
      %v508 = vadd.f32 0.0, %v507
      %509 = vmatmul.bf16.gmra.mxu0 %v440
      %v510 = vpop.f32.mrf.mxu0
      %v511 = vadd.f32 0.0, %v510
      %v512 = vpop.f32.mrf.mxu0
      %v513 = vadd.f32 0.0, %v512
      %514 = vmatmul.bf16.gmra.mxu0 %v443
      %v515 = vpop.f32.mrf.mxu0
      %v516 = vadd.f32 0.0, %v515
      %v517 = vpop.f32.mrf.mxu0
      %v518 = vadd.f32 0.0, %v517
      %519 = vmatmul.bf16.gmra.mxu0 %v446
      %v520 = vpop.f32.mrf.mxu0
      %v521 = vadd.f32 0.0, %v520
      %v522 = vpop.f32.mrf.mxu0
      %v523 = vadd.f32 0.0, %v522
      %524 = vmatmul.bf16.gmra.mxu0 %v449
      %v525 = vpop.f32.mrf.mxu0
      %v526 = vadd.f32 0.0, %v525
      %v527 = vpop.f32.mrf.mxu0
      %v528 = vadd.f32 0.0, %v527
      %529 = vmatmul.bf16.gmra.mxu0 %v452
      %v530 = vpop.f32.mrf.mxu0
      %v531 = vadd.f32 0.0, %v530
      %v532 = vpop.f32.mrf.mxu0
      %v533 = vadd.f32 0.0, %v532
      %534 = vmatmul.bf16.gmra.mxu0 %v455
      %v535 = vpop.f32.mrf.mxu0
      %v536 = vadd.f32 0.0, %v535
      %v537 = vpop.f32.mrf.mxu0
      %v538 = vadd.f32 0.0, %v537
      %539 = vmatmul.bf16.gmra.mxu0 %v458
      %v540 = vpop.f32.mrf.mxu0
      %v541 = vadd.f32 0.0, %v540
      %v542 = vpop.f32.mrf.mxu0
      %v543 = vadd.f32 0.0, %v542
      %544 = vmatmul.bf16.gmra.mxu0 %v461
      %v545 = vpop.f32.mrf.mxu0
      %v546 = vadd.f32 0.0, %v545
      %v547 = vpop.f32.mrf.mxu0
      %v548 = vadd.f32 0.0, %v547
      %549 = vmatmul.bf16.gmra.mxu0 %v464
      %v550 = vpop.f32.mrf.mxu0
      %v551 = vadd.f32 0.0, %v550
      %v552 = vpop.f32.mrf.mxu0
      %v553 = vadd.f32 0.0, %v552
      %554 = vdwg.mxu0
      %v555 = vadd.f32 %v257, %v476
      %v556 = vadd.f32 %v258, %v478
      %v557 = vadd.f32 %v259, %v481
      %v558 = vadd.f32 %v260, %v483
      %v559 = vadd.f32 %v261, %v486
      %v560 = vadd.f32 %v262, %v488
      %v561 = vadd.f32 %v263, %v491
      %v562 = vadd.f32 %v264, %v493
      %v563 = vadd.f32 %v265, %v496
      %v564 = vadd.f32 %v266, %v498
      %v565 = vadd.f32 %v267, %v501
      %v566 = vadd.f32 %v268, %v503
      %v567 = vadd.f32 %v269, %v506
      %v568 = vadd.f32 %v270, %v508
      %v569 = vadd.f32 %v271, %v511
      %v570 = vadd.f32 %v272, %v513
      %v571 = vadd.f32 %v273, %v516
      %v572 = vadd.f32 %v274, %v518
      %v573 = vadd.f32 %v275, %v521
      %v574 = vadd.f32 %v276, %v523
      %v575 = vadd.f32 %v277, %v526
      %v576 = vadd.f32 %v278, %v528
      %v577 = vadd.f32 %v279, %v531
      %v578 = vadd.f32 %v280, %v533
      %v579 = vadd.f32 %v281, %v536
      %v580 = vadd.f32 %v282, %v538
      %v581 = vadd.f32 %v283, %v541
      %v582 = vadd.f32 %v284, %v543
      %v583 = vadd.f32 %v285, %v546
      %v584 = vadd.f32 %v286, %v548
      %v585 = vadd.f32 %v287, %v551
      %v586 = vadd.f32 %v288, %v553
      %vm587 = vcmask 523264
      %588 = vst.msk [vmem:[#allocation2] sm:$0xff] %vm587, %v555
      %589 = vst.msk [vmem:[#allocation2 + $0x8] sm:$0xff] %vm587, %v556
      %590 = vst.msk [vmem:[#allocation2 + $0x10] sm:$0xff] %vm587, %v557
      %591 = vst.msk [vmem:[#allocation2 + $0x18] sm:$0xff] %vm587, %v558
      %592 = vst.msk [vmem:[#allocation2 + $0x20] sm:$0xff] %vm587, %v559
      %593 = vst.msk [vmem:[#allocation2 + $0x28] sm:$0xff] %vm587, %v560
      %594 = vst.msk [vmem:[#allocation2 + $0x30] sm:$0xff] %vm587, %v561
      %595 = vst.msk [vmem:[#allocation2 + $0x38] sm:$0xff] %vm587, %v562
      %596 = vst.msk [vmem:[#allocation2 + $0x40] sm:$0xff] %vm587, %v563
      %597 = vst.msk [vmem:[#allocation2 + $0x48] sm:$0xff] %vm587, %v564
      %598 = vst.msk [vmem:[#allocation2 + $0x50] sm:$0xff] %vm587, %v565
      %599 = vst.msk [vmem:[#allocation2 + $0x58] sm:$0xff] %vm587, %v566
      %600 = vst.msk [vmem:[#allocation2 + $0x60] sm:$0xff] %vm587, %v567
      %601 = vst.msk [vmem:[#allocation2 + $0x68] sm:$0xff] %vm587, %v568
      %602 = vst.msk [vmem:[#allocation2 + $0x70] sm:$0xff] %vm587, %v569
      %603 = vst.msk [vmem:[#allocation2 + $0x78] sm:$0xff] %vm587, %v570
      %604 = vst.msk [vmem:[#allocation2 + $0x80] sm:$0xff] %vm587, %v571
      %605 = vst.msk [vmem:[#allocation2 + $0x88] sm:$0xff] %vm587, %v572
      %606 = vst.msk [vmem:[#allocation2 + $0x90] sm:$0xff] %vm587, %v573
      %607 = vst.msk [vmem:[#allocation2 + $0x98] sm:$0xff] %vm587, %v574
      %608 = vst.msk [vmem:[#allocation2 + $0xa0] sm:$0xff] %vm587, %v575
      %609 = vst.msk [vmem:[#allocation2 + $0xa8] sm:$0xff] %vm587, %v576
      %610 = vst.msk [vmem:[#allocation2 + $0xb0] sm:$0xff] %vm587, %v577
      %611 = vst.msk [vmem:[#allocation2 + $0xb8] sm:$0xff] %vm587, %v578
      %612 = vst.msk [vmem:[#allocation2 + $0xc0] sm:$0xff] %vm587, %v579
      %613 = vst.msk [vmem:[#allocation2 + $0xc8] sm:$0xff] %vm587, %v580
      %614 = vst.msk [vmem:[#allocation2 + $0xd0] sm:$0xff] %vm587, %v581
      %615 = vst.msk [vmem:[#allocation2 + $0xd8] sm:$0xff] %vm587, %v582
      %616 = vst.msk [vmem:[#allocation2 + $0xe0] sm:$0xff] %vm587, %v583
      %617 = vst.msk [vmem:[#allocation2 + $0xe8] sm:$0xff] %vm587, %v584
      %618 = vst.msk [vmem:[#allocation2 + $0xf0] sm:$0xff] %vm587, %v585
      %619 = vst.msk [vmem:[#allocation2 + $0xf8] sm:$0xff] %vm587, %v586
      // Predicated region
      $region37: #{tpu_custom_call.1} parent=31 // pred_check
        %p620 = pneg %p220
      $region38: #{tpu_custom_call.1} parent=31 // pred_check_branch
        %622 = sbr.rel (%p620) target = $region40
      $region39: #{tpu_custom_call.1} parent=31 // pred_region
        %v623 = vld [vmem:[#allocation2] sm:$0xff]
        %v624 = vld [vmem:[#allocation2 + $0x8] sm:$0xff]
        %v625 = vld [vmem:[#allocation2 + $0x10] sm:$0xff]
        %v626 = vld [vmem:[#allocation2 + $0x18] sm:$0xff]
        %v627 = vld [vmem:[#allocation2 + $0x20] sm:$0xff]
        %v628 = vld [vmem:[#allocation2 + $0x28] sm:$0xff]
        %v629 = vld [vmem:[#allocation2 + $0x30] sm:$0xff]
        %v630 = vld [vmem:[#allocation2 + $0x38] sm:$0xff]
        %v631 = vld [vmem:[#allocation2 + $0x40] sm:$0xff]
        %v632 = vld [vmem:[#allocation2 + $0x48] sm:$0xff]
        %v633 = vld [vmem:[#allocation2 + $0x50] sm:$0xff]
        %v634 = vld [vmem:[#allocation2 + $0x58] sm:$0xff]
        %v635 = vld [vmem:[#allocation2 + $0x60] sm:$0xff]
        %v636 = vld [vmem:[#allocation2 + $0x68] sm:$0xff]
        %v637 = vld [vmem:[#allocation2 + $0x70] sm:$0xff]
        %v638 = vld [vmem:[#allocation2 + $0x78] sm:$0xff]
        %v639 = vld [vmem:[#allocation2 + $0x80] sm:$0xff]
        %v640 = vld [vmem:[#allocation2 + $0x88] sm:$0xff]
        %v641 = vld [vmem:[#allocation2 + $0x90] sm:$0xff]
        %v642 = vld [vmem:[#allocation2 + $0x98] sm:$0xff]
        %v643 = vld [vmem:[#allocation2 + $0xa0] sm:$0xff]
        %v644 = vld [vmem:[#allocation2 + $0xa8] sm:$0xff]
        %v645 = vld [vmem:[#allocation2 + $0xb0] sm:$0xff]
        %v646 = vld [vmem:[#allocation2 + $0xb8] sm:$0xff]
        %v647 = vld [vmem:[#allocation2 + $0xc0] sm:$0xff]
        %v648 = vld [vmem:[#allocation2 + $0xc8] sm:$0xff]
        %v649 = vld [vmem:[#allocation2 + $0xd0] sm:$0xff]
        %v650 = vld [vmem:[#allocation2 + $0xd8] sm:$0xff]
        %v651 = vld [vmem:[#allocation2 + $0xe0] sm:$0xff]
        %v652 = vld [vmem:[#allocation2 + $0xe8] sm:$0xff]
        %v653 = vld [vmem:[#allocation2 + $0xf0] sm:$0xff]
        %v654 = vld [vmem:[#allocation2 + $0xf8] sm:$0xff]
        %v655 = vld [vmem:[%s2] sm:$0x1]
        %v657 = vperm.slane %v655, 0
        %v659 = vadd.f32 %v623, %v657
        %v660 = vadd.f32 %v624, %v657
        %v661 = vadd.f32 %v625, %v657
        %v662 = vadd.f32 %v626, %v657
        %v663 = vadd.f32 %v627, %v657
        %v664 = vadd.f32 %v628, %v657
        %v665 = vadd.f32 %v629, %v657
        %v666 = vadd.f32 %v630, %v657
        %v667 = vadd.f32 %v631, %v657
        %v668 = vadd.f32 %v632, %v657
        %v669 = vadd.f32 %v633, %v657
        %v670 = vadd.f32 %v634, %v657
        %v671 = vadd.f32 %v635, %v657
        %v672 = vadd.f32 %v636, %v657
        %v673 = vadd.f32 %v637, %v657
        %v674 = vadd.f32 %v638, %v657
        %v675 = vadd.f32 %v639, %v657
        %v676 = vadd.f32 %v640, %v657
        %v677 = vadd.f32 %v641, %v657
        %v678 = vadd.f32 %v642, %v657
        %v679 = vadd.f32 %v643, %v657
        %v680 = vadd.f32 %v644, %v657
        %v681 = vadd.f32 %v645, %v657
        %v682 = vadd.f32 %v646, %v657
        %v683 = vadd.f32 %v647, %v657
        %v684 = vadd.f32 %v648, %v657
        %v685 = vadd.f32 %v649, %v657
        %v686 = vadd.f32 %v650, %v657
        %v687 = vadd.f32 %v651, %v657
        %v688 = vadd.f32 %v652, %v657
        %v689 = vadd.f32 %v653, %v657
        %v690 = vadd.f32 %v654, %v657
        %v691 = vmax.f32 %v659, 0.0
        %v692 = vmax.f32 %v660, 0.0
        %v693 = vmax.f32 %v661, 0.0
        %v694 = vmax.f32 %v662, 0.0
        %v695 = vmax.f32 %v663, 0.0
        %v696 = vmax.f32 %v664, 0.0
        %v697 = vmax.f32 %v665, 0.0
        %v698 = vmax.f32 %v666, 0.0
        %v699 = vmax.f32 %v667, 0.0
        %v700 = vmax.f32 %v668, 0.0
        %v701 = vmax.f32 %v669, 0.0
        %v702 = vmax.f32 %v670, 0.0
        %v703 = vmax.f32 %v671, 0.0
        %v704 = vmax.f32 %v672, 0.0
        %v705 = vmax.f32 %v673, 0.0
        %v706 = vmax.f32 %v674, 0.0
        %v707 = vmax.f32 %v675, 0.0
        %v708 = vmax.f32 %v676, 0.0
        %v709 = vmax.f32 %v677, 0.0
        %v710 = vmax.f32 %v678, 0.0
        %v711 = vmax.f32 %v679, 0.0
        %v712 = vmax.f32 %v680, 0.0
        %v713 = vmax.f32 %v681, 0.0
        %v714 = vmax.f32 %v682, 0.0
        %v715 = vmax.f32 %v683, 0.0
        %v716 = vmax.f32 %v684, 0.0
        %v717 = vmax.f32 %v685, 0.0
        %v718 = vmax.f32 %v686, 0.0
        %v719 = vmax.f32 %v687, 0.0
        %v720 = vmax.f32 %v688, 0.0
        %v721 = vmax.f32 %v689, 0.0
        %v722 = vmax.f32 %v690, 0.0
        %v723 = vpack.c.bf16 %v691, %v691
        %v724 = vpack.c.bf16 %v692, %v692
        %v725 = vpack.c.bf16 %v693, %v693
        %v726 = vpack.c.bf16 %v694, %v694
        %v727 = vpack.c.bf16 %v695, %v695
        %v728 = vpack.c.bf16 %v696, %v696
        %v729 = vpack.c.bf16 %v697, %v697
        %v730 = vpack.c.bf16 %v698, %v698
        %v731 = vpack.c.bf16 %v699, %v699
        %v732 = vpack.c.bf16 %v700, %v700
        %v733 = vpack.c.bf16 %v701, %v701
        %v734 = vpack.c.bf16 %v702, %v702
        %v735 = vpack.c.bf16 %v703, %v703
        %v736 = vpack.c.bf16 %v704, %v704
        %v737 = vpack.c.bf16 %v705, %v705
        %v738 = vpack.c.bf16 %v706, %v706
        %v739 = vpack.c.bf16 %v707, %v707
        %v740 = vpack.c.bf16 %v708, %v708
        %v741 = vpack.c.bf16 %v709, %v709
        %v742 = vpack.c.bf16 %v710, %v710
        %v743 = vpack.c.bf16 %v711, %v711
        %v744 = vpack.c.bf16 %v712, %v712
        %v745 = vpack.c.bf16 %v713, %v713
        %v746 = vpack.c.bf16 %v714, %v714
        %v747 = vpack.c.bf16 %v715, %v715
        %v748 = vpack.c.bf16 %v716, %v716
        %v749 = vpack.c.bf16 %v717, %v717
        %v750 = vpack.c.bf16 %v718, %v718
        %v751 = vpack.c.bf16 %v719, %v719
        %v752 = vpack.c.bf16 %v720, %v720
        %v753 = vpack.c.bf16 %v721, %v721
        %v754 = vpack.c.bf16 %v722, %v722
        %vm755 = vcmask 519168
        %756 = vst.msk [vmem:[%s217] sm:$0xf] %vm755, %v723
        %757 = vst.msk [vmem:[%s217 + $0x4] sm:$0xf] %vm755, %v724
        %758 = vst.msk [vmem:[%s217 + $0x8] sm:$0xf] %vm755, %v725
        %759 = vst.msk [vmem:[%s217 + $0xc] sm:$0xf] %vm755, %v726
        %760 = vst.msk [vmem:[%s217 + $0x10] sm:$0xf] %vm755, %v727
        %761 = vst.msk [vmem:[%s217 + $0x14] sm:$0xf] %vm755, %v728
        %762 = vst.msk [vmem:[%s217 + $0x18] sm:$0xf] %vm755, %v729
        %763 = vst.msk [vmem:[%s217 + $0x1c] sm:$0xf] %vm755, %v730
        %764 = vst.msk [vmem:[%s217 + $0x20] sm:$0xf] %vm755, %v731
        %765 = vst.msk [vmem:[%s217 + $0x24] sm:$0xf] %vm755, %v732
        %766 = vst.msk [vmem:[%s217 + $0x28] sm:$0xf] %vm755, %v733
        %767 = vst.msk [vmem:[%s217 + $0x2c] sm:$0xf] %vm755, %v734
        %768 = vst.msk [vmem:[%s217 + $0x30] sm:$0xf] %vm755, %v735
        %769 = vst.msk [vmem:[%s217 + $0x34] sm:$0xf] %vm755, %v736
        %770 = vst.msk [vmem:[%s217 + $0x38] sm:$0xf] %vm755, %v737
        %771 = vst.msk [vmem:[%s217 + $0x3c] sm:$0xf] %vm755, %v738
        %772 = vst.msk [vmem:[%s217 + $0x40] sm:$0xf] %vm755, %v739
        %773 = vst.msk [vmem:[%s217 + $0x44] sm:$0xf] %vm755, %v740
        %774 = vst.msk [vmem:[%s217 + $0x48] sm:$0xf] %vm755, %v741
        %775 = vst.msk [vmem:[%s217 + $0x4c] sm:$0xf] %vm755, %v742
        %776 = vst.msk [vmem:[%s217 + $0x50] sm:$0xf] %vm755, %v743
        %777 = vst.msk [vmem:[%s217 + $0x54] sm:$0xf] %vm755, %v744
        %778 = vst.msk [vmem:[%s217 + $0x58] sm:$0xf] %vm755, %v745
        %779 = vst.msk [vmem:[%s217 + $0x5c] sm:$0xf] %vm755, %v746
        %780 = vst.msk [vmem:[%s217 + $0x60] sm:$0xf] %vm755, %v747
        %781 = vst.msk [vmem:[%s217 + $0x64] sm:$0xf] %vm755, %v748
        %782 = vst.msk [vmem:[%s217 + $0x68] sm:$0xf] %vm755, %v749
        %783 = vst.msk [vmem:[%s217 + $0x6c] sm:$0xf] %vm755, %v750
        %784 = vst.msk [vmem:[%s217 + $0x70] sm:$0xf] %vm755, %v751
        %785 = vst.msk [vmem:[%s217 + $0x74] sm:$0xf] %vm755, %v752
        %786 = vst.msk [vmem:[%s217 + $0x78] sm:$0xf] %vm755, %v753
        %787 = vst.msk [vmem:[%s217 + $0x7c] sm:$0xf] %vm755, %v754
      $region40: #{tpu_custom_call.1} parent=31 // pred_fallthru
        _
      %s788 = smul.u32 32, %s18
      %p789 = scmp.lt.s32.totalorder %s788, 127
      %s790 = scalar_select %p789, %s788, 127
      %s791 = smul.addr %s790, 4
      %s792 = scalar_lea.vmem %s3, %s791
      // Predicated region
      $region41: #{tpu_custom_call.1} parent=31 // pred_check
        %p793 = pneg %p119
      $region42: #{tpu_custom_call.1} parent=31 // pred_check_branch
        %795 = sbr.rel (%p793) target = $region44
      $region43: #{tpu_custom_call.1} parent=31 // pred_region
        %s796 = smul.u32 32, %s18
      $region44: #{tpu_custom_call.1} parent=31 // pred_fallthru
        _
    $region32: #{tpu_custom_call.1} parent=5 // pred_fallthru
      _
    %p797 = scmp.le.s32.totalorder 2, %s9
    // Predicated region
    $region45: #{tpu_custom_call.1} parent=5 // pred_check
      %p798 = pneg %p797
    $region46: #{tpu_custom_call.1} parent=5 // pred_check_branch
      %800 = sbr.rel (%p798) target = $region48
    $region47: #{tpu_custom_call.1} parent=5 // pred_region
      %s801 = ssub.s32 %s9, 2
      // Predicated region
      $region49: #{tpu_custom_call.1} parent=47 // pred_check
        %p802 = pneg %p125
      $region50: #{tpu_custom_call.1} parent=47 // pred_check_branch
        %804 = sbr.rel (%p802) target = $region52
      $region51: #{tpu_custom_call.1} parent=47 // pred_region
        %s805 = smul.u32 32, %s20
        %p806 = scmp.lt.s32.totalorder %s805, 127
        %s807 = scalar_select %p806, %s805, 127
        %s808 = smul.addr %s807, 4
        %s809 = scalar_lea.vmem %s3, %s808
      $region52: #{tpu_custom_call.1} parent=47 // pred_fallthru
        _
    $region48: #{tpu_custom_call.1} parent=5 // pred_fallthru
      _
  $region6: #{tpu_custom_call.1} parent=0 // loop_footer
    %s13 = sadd.s32 1, %s9
  $region7: #{tpu_custom_call.1} parent=0 // loop_footer_branch
    %8 = sbr.rel target = $region3
  $region8: #{tpu_custom_call.1} parent=0 // loop_exit
    _

</llo_original>
